<compile_context>
chip_gen: v7x
topology: tpu7x:2x2x1
jax: 0.10.0
libtpu: 0.0.40
codegen_flags: <defaults>
</compile_context>

<pallas_src>
import functools

import jax
import jax.numpy as jnp
from jax import lax
from jax.experimental import pallas as pl
from jax.experimental.pallas import tpu as pltpu

_LANES = 128
_SUBLANES = 8
_MAX_BLOCK_ROWS = 4096            # 4096*128*4B = 2 MiB per f32 stream / step
_VMEM_LIMIT = 32 * 1024 * 1024    # safe on v5e / v6e / v7x


def _pow(x, gamma):
    # gamma=2.0 (default) -> cheap integer power on the VPU; otherwise pow.
    if float(gamma).is_integer():
        return lax.integer_pow(x, int(gamma))
    return jnp.power(x, gamma)


def _focal_elementwise(x, t, alpha, gamma):
    # Numerically-stable BCE-with-logits (same formula PyTorch uses):
    #   bce = max(x, 0) - x*t + log1p(exp(-|x|))
    e = jnp.exp(-jnp.abs(x))                              # transcendental #1
    bce = jnp.maximum(x, 0.0) - x * t + jnp.log1p(e)      # transcendental #2
    # confidence = exp(-bce); for binary targets this is exactly
    #   t*sigmoid(x) + (1-t)*(1-sigmoid(x))
    # which we rebuild from `e` with selects + one reciprocal instead of a
    # third transcendental.  (Exact for t in {0,1}; the module is a binary
    # focal loss.)
    sig = jnp.where(x >= 0.0, 1.0, e) / (1.0 + e)         # sigmoid(x)
    confidence = jnp.maximum(t * sig + (1.0 - t) * (1.0 - sig), 1e-9)
    alpha_t = alpha * t + (1.0 - alpha) * (1.0 - t)
    return alpha_t * _pow(1.0 - confidence, gamma) * bce


def _focal_reduce_kernel(x_ref, t_ref, out_ref, acc_ref, *,
                         alpha, gamma, n, steps_per_chunk, needs_mask):
    c = pl.program_id(0)   # chunk ('parallel', split across TCs on v7x)
    k = pl.program_id(1)   # step within chunk ('arbitrary')

    @pl.when(k == 0)
    def _():
        acc_ref[...] = jnp.zeros_like(acc_ref)

    x = x_ref[...].astype(jnp.float32)
    t = t_ref[...].astype(jnp.float32)
    loss = _focal_elementwise(x, t, alpha, gamma)
    block_rows = loss.shape[0]

    def _accumulate(v):
        # Fold the block down to one (8,128) vreg with elementwise VPU adds;
        # the cross-lane/sublane XLU reduce happens once per chunk at the end.
        acc_ref[...] += v.reshape(-1, _SUBLANES, _LANES).sum(axis=0)

    if needs_mask:
        # Only the globally-last block can contain padding / overrun rows, so
        # pay the iota + compare + select only there.
        is_last = jnp.logical_and(c == pl.num_programs(0) - 1,
                                  k == pl.num_programs(1) - 1)

        @pl.when(jnp.logical_not(is_last))
        def _():
            _accumulate(loss)

        @pl.when(is_last)
        def _():
            blk = c * steps_per_chunk + k
            row = lax.broadcasted_iota(jnp.int32, loss.shape, 0) + blk * block_rows
            lane = lax.broadcasted_iota(jnp.int32, loss.shape, 1)
            flat = row * _LANES + lane
            # select (not multiply), so garbage/NaN in the OOB region is safe.
            _accumulate(jnp.where(flat < n, loss, 0.0))
    else:
        _accumulate(loss)

    @pl.when(k == pl.num_programs(1) - 1)
    def _():
        out_ref[0, 0] = jnp.sum(acc_ref[...])


def _focal_none_kernel(x_ref, t_ref, o_ref, *, alpha, gamma):
    x = x_ref[...].astype(jnp.float32)
    t = t_ref[...].astype(jnp.float32)
    o_ref[...] = _focal_elementwise(x, t, alpha, gamma).astype(o_ref.dtype)


def focal_loss(inputs, targets, alpha=0.25, gamma=2.0, reduction="mean"):
    """Pallas-TPU equivalent of FocalLoss.forward(inputs, targets)."""
    orig_shape = inputs.shape
    orig_dtype = inputs.dtype

    x = inputs.reshape(-1)                       # keep original dtype (no upcast)
    t = targets.reshape(-1)
    if not jnp.issubdtype(t.dtype, jnp.floating):
        t = t.astype(orig_dtype)                 # 'targets.float()' equivalent
    n = x.shape[0]

    if n == 0:
        if reduction == "mean":
            return jnp.asarray(jnp.nan, dtype=orig_dtype)   # torch: mean of empty
        if reduction == "sum":
            return jnp.zeros((), dtype=orig_dtype)
        return jnp.zeros(orig_shape, dtype=orig_dtype)

    # Lane-dense 2-D slab; pad only to the (8,128) tile boundary (<=1023 elems).
    rows = pl.cdiv(n, _LANES)
    rows8 = pl.cdiv(rows, _SUBLANES) * _SUBLANES
    pad = rows8 * _LANES - n
    if pad:
        x = jnp.pad(x, (0, pad))
        t = jnp.pad(t, (0, pad))
    x2 = x.reshape(rows8, _LANES)
    t2 = t.reshape(rows8, _LANES)

    block_rows = min(_MAX_BLOCK_ROWS, rows8)
    total_steps = pl.cdiv(rows8, block_rows)
    # The last grid block may hold pad elements and/or overrun rows8.
    needs_mask = (pad != 0) or (rows8 % block_rows != 0)

    in_bytes = n * (x2.dtype.itemsize + t2.dtype.itemsize)

    if reduction in ("mean", "sum"):
        # Leading 'parallel' chunk axis so v7x's two TensorCores split the
        # reduction; per-chunk partial sums are combined in the wrapper.
        if total_steps >= 2 and total_steps % 2 == 0:
            num_chunks, steps_per_chunk = 2, total_steps // 2
        else:
            num_chunks, steps_per_chunk = 1, total_steps

        kernel = functools.partial(
            _focal_reduce_kernel,
            alpha=float(alpha), gamma=float(gamma), n=n,
            steps_per_chunk=steps_per_chunk, needs_mask=needs_mask)

        blk = pl.BlockSpec((block_rows, _LANES),
                           lambda c, k: (c * steps_per_chunk + k, 0))
        partial = pl.pallas_call(
            kernel,
            out_shape=jax.ShapeDtypeStruct((num_chunks, 1), jnp.float32),
            grid_spec=pltpu.PrefetchScalarGridSpec(
                num_scalar_prefetch=0,
                grid=(num_chunks, steps_per_chunk),
                in_specs=[blk, blk],
                out_specs=pl.BlockSpec((1, 1), lambda c, k: (c, 0),
                                       memory_space=pltpu.SMEM),
                scratch_shapes=[pltpu.VMEM((_SUBLANES, _LANES), jnp.float32)],
            ),
            compiler_params=pltpu.CompilerParams(
                dimension_semantics=("parallel", "arbitrary"),
                vmem_limit_bytes=_VMEM_LIMIT),
            cost_estimate=pl.CostEstimate(
                flops=15 * n, transcendentals=2 * n, bytes_accessed=in_bytes),
        )(x2, t2)

        total = jnp.sum(partial)
        if reduction == "mean":
            total = total / jnp.float32(n)
        return total.astype(orig_dtype)

    # reduction == 'none': output written directly in the input dtype; padded
    # tail elements are simply discarded afterwards (no mask needed).
    kernel = functools.partial(_focal_none_kernel,
                               alpha=float(alpha), gamma=float(gamma))
    blk = pl.BlockSpec((block_rows, _LANES), lambda i: (i, 0))
    out = pl.pallas_call(
        kernel,
        out_shape=jax.ShapeDtypeStruct((rows8, _LANES), orig_dtype),
        grid_spec=pltpu.PrefetchScalarGridSpec(
            num_scalar_prefetch=0,
            grid=(total_steps,),
            in_specs=[blk, blk],
            out_specs=blk,
        ),
        compiler_params=pltpu.CompilerParams(
            dimension_semantics=("parallel",),
            vmem_limit_bytes=_VMEM_LIMIT),
        cost_estimate=pl.CostEstimate(
            flops=15 * n, transcendentals=2 * n,
            bytes_accessed=in_bytes + n * jnp.dtype(orig_dtype).itemsize),
    )(x2, t2)
    return out.reshape(-1)[:n].reshape(orig_shape)


def _focal_loss_ref(inputs, targets, alpha=0.25, gamma=2.0, reduction="mean"):
    x = inputs.astype(jnp.float32)
    t = targets.astype(jnp.float32)
    bce = jnp.maximum(x, 0.0) - x * t + jnp.log1p(jnp.exp(-jnp.abs(x)))
    conf = jnp.maximum(jnp.exp(-bce), 1e-9)
    alpha_t = alpha * t + (1.0 - alpha) * (1.0 - t)
    loss = alpha_t * (1.0 - conf) ** gamma * bce
    if reduction == "mean":
        return loss.mean()
    if reduction == "sum":
        return loss.sum()
    return loss


if __name__ == "__main__":
    key = jax.random.PRNGKey(0)
    k_x, k_t, k_x2, k_t2 = jax.random.split(key, 4)
    failures = []

    # Module's conceptual NCHW layout (n = 2048, already (8,128)-aligned).
    inputs = jax.random.normal(k_x, (2, 4, 16, 16), dtype=jnp.float32) * 2.0
    targets = jax.random.bernoulli(k_t, p=0.3, shape=(2, 4, 16, 16)).astype(jnp.float32)
    for red in ("mean", "sum", "none"):
        out = jax.block_until_ready(focal_loss(inputs, targets, reduction=red))
        ref = _focal_loss_ref(inputs, targets, reduction=red)
        if not jnp.allclose(out, ref, rtol=1e-5, atol=1e-6):
            failures.append(("f32", red))

    # Misaligned element count (945 elems) exercises the masked last block.
    inputs_m = jax.random.normal(k_x2, (3, 5, 7, 9), dtype=jnp.float32)
    targets_m = jax.random.bernoulli(k_t2, p=0.5, shape=(3, 5, 7, 9)).astype(jnp.float32)
    for red in ("mean", "sum", "none"):
        out = jax.block_until_ready(focal_loss(inputs_m, targets_m, reduction=red))
        ref = _focal_loss_ref(inputs_m, targets_m, reduction=red)
        if not jnp.allclose(out, ref, rtol=1e-5, atol=1e-6):
            failures.append(("f32-odd", red))

    # bf16 inputs stream at 2 B/elem (no wrapper upcast, bf16 'none' output).
    inputs_b = inputs.astype(jnp.bfloat16)
    targets_b = targets.astype(jnp.bfloat16)
    for red in ("mean", "none"):
        out = jax.block_until_ready(focal_loss(inputs_b, targets_b, reduction=red))
        ref = _focal_loss_ref(inputs_b, targets_b, reduction=red)
        if not jnp.allclose(jnp.asarray(out, jnp.float32),
                            jnp.asarray(ref, jnp.float32),
                            rtol=2e-2, atol=1e-3):
            failures.append(("bf16", red))

    if failures:
        print("MISMATCH", failures)
    else:
        print("KERNEL_OK")
</pallas_src>

<mosaic_0001>
module attributes {stable_mosaic.version = 11 : i64} {
  func.func @_focal_reduce_kernel(%arg0: i32, %arg1: i32, %arg2: memref<16x128xf32, #tpu.memory_space<vmem>>, %arg3: memref<16x128xf32, #tpu.memory_space<vmem>>, %arg4: memref<1x1xf32, #tpu.memory_space<smem>>, %arg5: memref<8x128xf32, #tpu.memory_space<vmem>>) attributes {dimension_semantics = [#tpu.dimension_semantics<parallel>, #tpu.dimension_semantics<arbitrary>], iteration_bounds = array<i64: 1, 1>, scalar_prefetch = 0 : i64, scratch_operands = 1 : i64, tpu.core_type = #tpu.core_type<tc>, window_params = [{transform_indices = @transform_0, window_bounds = array<i64: 16, 128>}, {transform_indices = @transform_1, window_bounds = array<i64: 16, 128>}, {transform_indices = @transform_2, window_bounds = array<i64: 1, 1>}]} {
    %c0_i32 = arith.constant 0 : i32
    %0 = arith.cmpi eq, %arg1, %c0_i32 : i32
    %1 = arith.extui %0 : i1 to i32
    %c0_i32_0 = arith.constant 0 : i32
    %2 = arith.cmpi ne, %1, %c0_i32_0 : i32
    scf.if %2 {
      %cst_22 = arith.constant 0.000000e+00 : f32
      %51 = vector.broadcast %cst_22 : f32 to vector<8x128xf32>
      %c0_23 = arith.constant 0 : index
      %c0_24 = arith.constant 0 : index
      %52 = vector.load %arg5[%c0_23, %c0_24] : memref<8x128xf32, #tpu.memory_space<vmem>>, vector<8x128xf32>
      tpu.vector_store %arg5[%c0_23, %c0_24], %51 {strides = array<i32>} : memref<8x128xf32, #tpu.memory_space<vmem>>, vector<8x128xf32>,
    } else {
    }
    %c0 = arith.constant 0 : index
    %c0_1 = arith.constant 0 : index
    %3 = vector.load %arg2[%c0, %c0_1] : memref<16x128xf32, #tpu.memory_space<vmem>>, vector<16x128xf32>
    %c0_2 = arith.constant 0 : index
    %c0_3 = arith.constant 0 : index
    %4 = vector.load %arg3[%c0_2, %c0_3] : memref<16x128xf32, #tpu.memory_space<vmem>>, vector<16x128xf32>
    %5 = math.absf %3 : vector<16x128xf32>
    %cst = arith.constant 0.000000e+00 : f32
    %6 = vector.broadcast %cst : f32 to vector<16x128xf32>
    %7 = arith.subf %6, %5 : vector<16x128xf32>
    %8 = math.exp %7 : vector<16x128xf32>
    %cst_4 = arith.constant 0.000000e+00 : f32
    %9 = vector.broadcast %cst_4 : f32 to vector<16x128xf32>
    %10 = arith.maximumf %3, %9 : vector<16x128xf32>
    %11 = arith.mulf %3, %4 : vector<16x128xf32>
    %12 = arith.subf %10, %11 : vector<16x128xf32>
    %13 = math.log1p %8 : vector<16x128xf32>
    %14 = arith.addf %12, %13 : vector<16x128xf32>
    %cst_5 = arith.constant 0.000000e+00 : f32
    %15 = vector.broadcast %cst_5 : f32 to vector<16x128xf32>
    %16 = arith.cmpf oge, %3, %15 : vector<16x128xf32>
    %cst_6 = arith.constant 1.000000e+00 : f32
    %17 = vector.broadcast %cst_6 : f32 to vector<16x128xf32>
    %18 = arith.select %16, %17, %8 : vector<16x128xi1>, vector<16x128xf32>
    %cst_7 = arith.constant 1.000000e+00 : f32
    %19 = vector.broadcast %cst_7 : f32 to vector<16x128xf32>
    %20 = arith.addf %19, %8 : vector<16x128xf32>
    %21 = arith.divf %18, %20 : vector<16x128xf32>
    %22 = arith.mulf %4, %21 : vector<16x128xf32>
    %cst_8 = arith.constant 1.000000e+00 : f32
    %23 = vector.broadcast %cst_8 : f32 to vector<16x128xf32>
    %24 = arith.subf %23, %4 : vector<16x128xf32>
    %cst_9 = arith.constant 1.000000e+00 : f32
    %25 = vector.broadcast %cst_9 : f32 to vector<16x128xf32>
    %26 = arith.subf %25, %21 : vector<16x128xf32>
    %27 = arith.mulf %24, %26 : vector<16x128xf32>
    %28 = arith.addf %22, %27 : vector<16x128xf32>
    %cst_10 = arith.constant 9.99999971E-10 : f32
    %29 = vector.broadcast %cst_10 : f32 to vector<16x128xf32>
    %30 = arith.maximumf %28, %29 : vector<16x128xf32>
    %cst_11 = arith.constant 2.500000e-01 : f32
    %31 = vector.broadcast %cst_11 : f32 to vector<16x128xf32>
    %32 = arith.mulf %31, %4 : vector<16x128xf32>
    %cst_12 = arith.constant 1.000000e+00 : f32
    %33 = vector.broadcast %cst_12 : f32 to vector<16x128xf32>
    %34 = arith.subf %33, %4 : vector<16x128xf32>
    %cst_13 = arith.constant 7.500000e-01 : f32
    %35 = vector.broadcast %cst_13 : f32 to vector<16x128xf32>
    %36 = arith.mulf %35, %34 : vector<16x128xf32>
    %37 = arith.addf %32, %36 : vector<16x128xf32>
    %cst_14 = arith.constant 1.000000e+00 : f32
    %38 = vector.broadcast %cst_14 : f32 to vector<16x128xf32>
    %39 = arith.subf %38, %30 : vector<16x128xf32>
    %40 = arith.mulf %39, %39 : vector<16x128xf32>
    %41 = arith.mulf %37, %40 : vector<16x128xf32>
    %42 = arith.mulf %41, %14 : vector<16x128xf32>
    %c0_15 = arith.constant 0 : index
    %c0_16 = arith.constant 0 : index
    %43 = vector.load %arg5[%c0_15, %c0_16] : memref<8x128xf32, #tpu.memory_space<vmem>>, vector<8x128xf32>
    %44 = vector.shape_cast %42 : vector<16x128xf32> to vector<2x8x128xf32>
    %cst_17 = arith.constant dense<0.000000e+00> : vector<8x128xf32>
    %45 = vector.multi_reduction <add>, %44, %cst_17 [0] : vector<2x8x128xf32> to vector<8x128xf32>
    %46 = arith.addf %43, %45 : vector<8x128xf32>
    %c0_18 = arith.constant 0 : index
    %c0_19 = arith.constant 0 : index
    %47 = vector.load %arg5[%c0_18, %c0_19] : memref<8x128xf32, #tpu.memory_space<vmem>>, vector<8x128xf32>
    tpu.vector_store %arg5[%c0_18, %c0_19], %46 {strides = array<i32>} : memref<8x128xf32, #tpu.memory_space<vmem>>, vector<8x128xf32>,
    %c0_i32_20 = arith.constant 0 : i32
    %48 = arith.cmpi eq, %arg1, %c0_i32_20 : i32
    %49 = arith.extui %48 : i1 to i32
    %c0_i32_21 = arith.constant 0 : i32
    %50 = arith.cmpi ne, %49, %c0_i32_21 : i32
    scf.if %50 {
      %c0_22 = arith.constant 0 : index
      %c0_23 = arith.constant 0 : index
      %51 = vector.load %arg5[%c0_22, %c0_23] : memref<8x128xf32, #tpu.memory_space<vmem>>, vector<8x128xf32>
      %52 = vector.shape_cast %51 : vector<8x128xf32> to vector<1x8x128xf32>
      %cst_24 = arith.constant dense<0.000000e+00> : vector<1xf32>
      %53 = vector.multi_reduction <add>, %52, %cst_24 [1, 2] : vector<1x8x128xf32> to vector<1xf32>
      %54 = vector.shape_cast %53 : vector<1xf32> to vector<1x1x1xf32>
      %55 = vector.extract %54[0, 0, 0] : f32 from vector<1x1x1xf32>
      %c0_25 = arith.constant 0 : index
      %c0_26 = arith.constant 0 : index
      %56 = memref.load %arg4[%c0_25, %c0_26] : memref<1x1xf32, #tpu.memory_space<smem>>
      memref.store %55, %arg4[%c0_25, %c0_26] : memref<1x1xf32, #tpu.memory_space<smem>>
    } else {
    }
    return
  }
  func.func @transform_0(%arg0: i32, %arg1: i32) -> (i32, i32) {
    %c1_i32 = arith.constant 1 : i32
    %0 = arith.muli %arg0, %c1_i32 : i32
    %1 = arith.addi %0, %arg1 : i32
    %c0_i32 = arith.constant 0 : i32
    %c0_i32_0 = arith.constant 0 : i32
    return %1, %c0_i32 : i32, i32
  }
  func.func @transform_1(%arg0: i32, %arg1: i32) -> (i32, i32) {
    %c1_i32 = arith.constant 1 : i32
    %0 = arith.muli %arg0, %c1_i32 : i32
    %1 = arith.addi %0, %arg1 : i32
    %c0_i32 = arith.constant 0 : i32
    %c0_i32_0 = arith.constant 0 : i32
    return %1, %c0_i32 : i32, i32
  }
  func.func @transform_2(%arg0: i32, %arg1: i32) -> (i32, i32) {
    %c0_i32 = arith.constant 0 : i32
    %c0_i32_0 = arith.constant 0 : i32
    return %arg0, %c0_i32 : i32, i32
  }
}

</mosaic_0001>

<llo_original>
// kernel: tpu_custom_call.1
$region0: #{tpu_custom_call.1}
  #allocation0 [shape = 'u32[]', space=smem, size = 0x4, offset = 0x4, fixed_abs, tag = 'smem constant byte address 0x4 - core index']
  #allocation1 [shape = 'u32[144,128]{1,0:T(1,128)}', space=vmem, size = 0x12000, scoped, tag = 'internal scratch']
  #allocation2 [shape = 'f32[8,128]{1,0:T(8,128)}', space=vmem, size = 0x1000, scoped, tag = 'scratch operand']
  %s0 = inlined_call_operand.hbm [shape: f32[16,128], index: 0, kind: input, shape index: {}]
  %s1 = inlined_call_operand.hbm [shape: f32[16,128], index: 1, kind: input, shape index: {}]
  %s2 = inlined_call_operand.hbm [shape: f32[1,1], index: 2, kind: output, shape index: {}]
  %s3 = sld [smem:[#allocation0]]
  $region34: #{tpu_custom_call.1} parent=0
    _
  %s5 = ssub.s32 1, %s3
  %s6 = scalar_select 0, %s5, %s3
  $region1: #{tpu_custom_call.1} parent=0
    #allocation3 [shape = 'u8[8192]{0}', space=vmem, size = 0x2000, scoped, tag = 'input window, operand 0, single buffered']
    #allocation4 [shape = 's32[1]{0}', space=sflag, size = 0x4, scoped, tag = 'scoped memory for tpu_custom_call.1']
    #allocation5 [shape = 's32[1]{0}', space=sflag, size = 0x4, scoped, tag = 'scoped memory for tpu_custom_call.1']
    #allocation6 [shape = 'u8[8192]{0}', space=vmem, size = 0x2000, scoped, tag = 'input window, operand 1, single buffered']
    #allocation7 [shape = 's32[1]{0}', space=sflag, size = 0x4, scoped, tag = 'scoped memory for tpu_custom_call.1']
    #allocation8 [shape = 'u8[512]{0}', space=smem, size = 0x200, scoped, tag = 'output window, operand 0, single buffered']
    %7 = vsyncpa [#allocation4], 0
    %8 = vsyncpa [#allocation7], 0
    %9 = vsyncpa [#allocation5], 0
    // Predicated region
    $region2: #{tpu_custom_call.1} parent=1 // pred_check
      _
    $region3: #{tpu_custom_call.1} parent=1 // pred_check_branch
      %11 = sbr.rel (0) target = $region5
    $region4: #{tpu_custom_call.1} parent=1 // pred_region
      %s12 = sadd.s32 0, 0
      %s13 = smul.u32 2, %s12
      %s15 = ssub.s32 256, 256
      %16 = vsyncadd [#allocation4], %s15
      %s17 = smul.addr %s13, 128
      %s18 = scalar_lea.hbm %s0, %s17
      %s19 = sshll.u32 [#allocation3], 4
      %s20 = int_to_ptr.vmem [resolvable:$true] %s19
      %25 = dma.hbm_to_vmem [thread:$0]  %s18, 256, %s20, [#allocation4], 128, 128, 8
    $region5: #{tpu_custom_call.1} parent=1 // pred_fallthru
      _
    // Predicated region
    $region6: #{tpu_custom_call.1} parent=1 // pred_check
      _
    $region7: #{tpu_custom_call.1} parent=1 // pred_check_branch
      %27 = sbr.rel (0) target = $region9
    $region8: #{tpu_custom_call.1} parent=1 // pred_region
      %s28 = sadd.s32 0, 0
      %s29 = smul.u32 2, %s28
      %s31 = ssub.s32 256, 256
      %32 = vsyncadd [#allocation7], %s31
      %s33 = smul.addr %s29, 128
      %s34 = scalar_lea.hbm %s1, %s33
      %s35 = sshll.u32 [#allocation6], 4
      %s36 = int_to_ptr.vmem [resolvable:$true] %s35
      %41 = dma.hbm_to_vmem [thread:$0]  %s34, 256, %s36, [#allocation7], 128, 128, 8
    $region9: #{tpu_custom_call.1} parent=1 // pred_fallthru
      _
    // Predicated region
    $region10: #{tpu_custom_call.1} parent=1 // pred_check
      _
    $region11: #{tpu_custom_call.1} parent=1 // pred_check_branch
      %43 = sbr.rel (0) target = $region13
    $region12: #{tpu_custom_call.1} parent=1 // pred_region
      %44 = dma.done [#allocation4], 256
    $region13: #{tpu_custom_call.1} parent=1 // pred_fallthru
      _
    // Predicated region
    $region14: #{tpu_custom_call.1} parent=1 // pred_check
      _
    $region15: #{tpu_custom_call.1} parent=1 // pred_check_branch
      %46 = sbr.rel (0) target = $region17
    $region16: #{tpu_custom_call.1} parent=1 // pred_region
      %47 = dma.done [#allocation7], 256
    $region17: #{tpu_custom_call.1} parent=1 // pred_fallthru
      _
    %s48 = sadd.s32 0, 0
    %s49 = smul.u32 2, %s48
    %s50 = sadd.s32 0, 0
    %s51 = smul.u32 2, %s50
    %p52 = scmp.eq.s32.totalorder 0, 0
    // Predicated region
    $region18: #{tpu_custom_call.1} parent=1 // pred_check
      %p53 = pneg %p52
    $region19: #{tpu_custom_call.1} parent=1 // pred_check_branch
      %55 = sbr.rel (%p53) target = $region21
    $region20: #{tpu_custom_call.1} parent=1 // pred_region
      %56 = vst [vmem:[#allocation2] sm:$0xff] 0.0
    $region21: #{tpu_custom_call.1} parent=1 // pred_fallthru
      _
    %v57 = vld [vmem:[#allocation3] sm:$0xff]
    %v58 = vld [vmem:[#allocation3 + $0x8] sm:$0xff]
    %v59 = vld [vmem:[#allocation6] sm:$0xff]
    %v60 = vld [vmem:[#allocation6 + $0x8] sm:$0xff]
    %v61 = vand.u32 2147483647, %v57
    %v62 = vand.u32 2147483647, %v58
    %v63 = vsub.f32 0.0, %v61
    %v64 = vsub.f32 0.0, %v62
    %v65 = vmul.f32 %v63, 1.442695
    %v66 = vpow.pop %v65
    %v67 = vmul.f32 %v64, 1.442695
    %v68 = vpow.pop %v67
    %v69 = vmax.f32 %v57, 0.0
    %v70 = vmax.f32 %v58, 0.0
    %v71 = vmul.f32 %v57, %v59
    %v72 = vmul.f32 %v58, %v60
    %v73 = vsub.f32 %v69, %v71
    %v74 = vsub.f32 %v70, %v72
    %v75 = vadd.f32 %v66, 1.0
    %v76 = vlog2.pop %v75
    %v77 = vmul.f32 %v76, 0.6931472
    %v78 = vmul.f32 -0.5, %v66
    %v79 = vadd.f32 %v78, 1.0
    %v80 = vmul.f32 %v79, %v66
    %v81 = vand.u32 2147483647, %v66
    %vm82 = vcmp.lt.f32.partialorder %v81, 0.0004427343
    %v83 = vsel %vm82, %v80, %v77
    %v84 = vadd.f32 %v68, 1.0
    %v85 = vlog2.pop %v84
    %v86 = vmul.f32 %v85, 0.6931472
    %v87 = vmul.f32 -0.5, %v68
    %v88 = vadd.f32 %v87, 1.0
    %v89 = vmul.f32 %v88, %v68
    %v90 = vand.u32 2147483647, %v68
    %vm91 = vcmp.lt.f32.partialorder %v90, 0.0004427343
    %v92 = vsel %vm91, %v89, %v86
    %v93 = vadd.f32 %v73, %v83
    %v94 = vadd.f32 %v74, %v92
    %vm95 = vcmp.ge.f32.partialorder %v57, 0.0
    %vm96 = vcmp.ge.f32.partialorder %v58, 0.0
    %v97 = vsel %vm95, 1.0, %v66
    %v98 = vsel %vm96, 1.0, %v68
    %v99 = vadd.f32 %v66, 1.0
    %v100 = vadd.f32 %v68, 1.0
    %v101 = vrcp.pop %v99
    %v102 = vmul.f32 %v97, %v101
    %v103 = vrcp.pop %v100
    %v104 = vmul.f32 %v98, %v103
    %v105 = vmul.f32 %v59, %v102
    %v106 = vmul.f32 %v60, %v104
    %v107 = vsub.f32 1.0, %v59
    %v108 = vsub.f32 1.0, %v60
    %v109 = vsub.f32 1.0, %v102
    %v110 = vsub.f32 1.0, %v104
    %v111 = vmul.f32 %v107, %v109
    %v112 = vmul.f32 %v108, %v110
    %v113 = vadd.f32 %v105, %v111
    %v114 = vadd.f32 %v106, %v112
    %v115 = vmax.f32 %v113, 1e-09
    %v116 = vmax.f32 %v114, 1e-09
    %v117 = vmul.f32 %v59, 0.25
    %v118 = vmul.f32 %v60, 0.25
    %v119 = vmul.f32 %v107, 0.75
    %v120 = vmul.f32 %v108, 0.75
    %v121 = vadd.f32 %v117, %v119
    %v122 = vadd.f32 %v118, %v120
    %v123 = vsub.f32 1.0, %v115
    %v124 = vsub.f32 1.0, %v116
    %v125 = vmul.f32 %v123, %v123
    %v126 = vmul.f32 %v124, %v124
    %v127 = vmul.f32 %v121, %v125
    %v128 = vmul.f32 %v122, %v126
    %v129 = vmul.f32 %v127, %v93
    %v130 = vmul.f32 %v128, %v94
    %v131 = vld [vmem:[#allocation2] sm:$0xff]
    %v132 = vadd.f32 %v129, %v130
    %v133 = vadd.f32 %v131, %v132
    %134 = vst [vmem:[#allocation2] sm:$0xff] %v133
    // Predicated region
    $region22: #{tpu_custom_call.1} parent=1 // pred_check
      %p135 = pneg %p52
    $region23: #{tpu_custom_call.1} parent=1 // pred_check_branch
      %137 = sbr.rel (%p135) target = $region25
    $region24: #{tpu_custom_call.1} parent=1 // pred_region
      %v138 = vld [vmem:[#allocation2] sm:$0xff]
      %139 = vadd.xlane.f32.xlu0 %v138
      %v140 = vpop.xlane.xlu0 %139
      %v141 = vrot.slane %v140, 4
      %v142 = vadd.f32 %v140, %v141
      %v143 = vrot.slane %v142, 2
      %v144 = vadd.f32 %v142, %v143
      %v145 = vrot.slane %v144, 1
      %v146 = vadd.f32 %v144, %v145
      %s147 = vtos %v146
      %s148 = scalar_lea.smem [#allocation8], 0
      %149 = sst [smem:[%s148]] %s147
    $region25: #{tpu_custom_call.1} parent=1 // pred_fallthru
      _
    // Predicated region
    $region26: #{tpu_custom_call.1} parent=1 // pred_check
      _
    $region27: #{tpu_custom_call.1} parent=1 // pred_check_branch
      %151 = sbr.rel (0) target = $region29
    $region28: #{tpu_custom_call.1} parent=1 // pred_region
      %s153 = ssub.s32 16, 16
      %154 = vsyncadd [#allocation5], %s153
      %157 = dma.smem_to_hbm [#allocation8], 16, %s2, [#allocation5]
    $region29: #{tpu_custom_call.1} parent=1 // pred_fallthru
      _
    // Predicated region
    $region30: #{tpu_custom_call.1} parent=1 // pred_check
      _
    $region31: #{tpu_custom_call.1} parent=1 // pred_check_branch
      %159 = sbr.rel (0) target = $region33
    $region32: #{tpu_custom_call.1} parent=1 // pred_region
      %160 = dma.done [#allocation5], 16
    $region33: #{tpu_custom_call.1} parent=1 // pred_fallthru
      _
    %161 = sfence
    %162 = vsyncpa [#allocation4], 1
    %163 = vsyncpa [#allocation7], 1
    %164 = vsyncpa [#allocation5], 1

</llo_original>
